<compile_context>
chip_gen: v6e
topology: v6e:2x2x1
jax: 0.10.0
libtpu: 0.0.40
codegen_flags: <defaults>
</compile_context>

<pallas_src>
import functools
import math

import jax
import jax.numpy as jnp
from jax import lax
from jax.experimental import pallas as pl
from jax.experimental.pallas import tpu as pltpu


def _round_up(a: int, b: int) -> int:
    return (a + b - 1) // b * b


def _vmem_budget_bytes() -> int:
    """~80% of physical VMEM; conservative fallback that is safe on v7x (64 MiB/TC)."""
    try:
        cap = int(pltpu.get_tpu_info().vmem_capacity_bytes)
        if cap > 0:
            return cap * 4 // 5
    except Exception:
        pass
    return 48 << 20


def _choose_tiles(M, C, H, tm, th):
    C_pad = _round_up(C, 128)
    H_pad = _round_up(H, 128)
    # Hidden tile: multiple of 128 (512 default keeps the 256-wide v6e/v7x MXU full),
    # and must divide H_pad so no padding beyond 128 alignment is introduced.
    th = max(128, min(th, H_pad))
    th = th // 128 * 128
    while H_pad % th:
        th -= 128
    # Row tile: multiple of 8; shrink if it would waste >= half a tile of row padding.
    tm = max(8, min(tm, _round_up(M, 8)))
    tm = _round_up(tm, 8)
    while tm > 128 and _round_up(M, tm) - M >= tm // 2:
        tm = _round_up(max(8, tm // 2), 8)
    # v7x megacore: prefer >=2 row tiles (one per TensorCore) when tiles stay large.
    if _round_up(M, tm) // tm < 2 and tm > 256:
        tm = _round_up((M + 1) // 2, 8)
    return tm, th, C_pad, H_pad


def _mlp_kernel(x_ref, w1_ref, b1_ref, w2_ref, b2_ref, o_ref, acc_ref, *,
                th, resident, approximate):
    k = pl.program_id(1)

    @pl.when(k == 0)
    def _init():
        # Output bias folded into the accumulator init (no finalize-path VALU add).
        acc_ref[...] = jnp.broadcast_to(
            b2_ref[...].astype(jnp.float32), acc_ref.shape)

    off = pl.multiple_of(k * th, 128)
    if resident:
        # Weights live in VMEM for the whole grid; take the k-th hidden chunk.
        w1_blk = w1_ref[:, pl.ds(off, th)]
        w2_blk = w2_ref[pl.ds(off, th), :]
    else:
        # Streaming path: BlockSpec already delivers the k-th chunk.
        w1_blk = w1_ref[...]
        w2_blk = w2_ref[...]
    b1_blk = b1_ref[:, pl.ds(off, th)].astype(jnp.float32)

    # First linear chunk: [tm, C] @ [C, th] + [1, th]  (f32 accumulate on the MXU).
    h = jnp.dot(x_ref[...], w1_blk, preferred_element_type=jnp.float32)
    h = h + b1_blk
    if approximate:
        # tanh GELU -> EUP (separate VLIW slot); numerics differ slightly from torch.
        h = jax.nn.gelu(h, approximate=True)
    else:
        # Exact erf GELU in f32, matching torch.nn.GELU() default.
        h = 0.5 * h * (1.0 + lax.erf(h * (1.0 / math.sqrt(2.0))))
    # Second linear chunk, accumulated over the hidden-dim grid axis.
    acc_ref[...] += jnp.dot(h.astype(w2_blk.dtype), w2_blk,
                            preferred_element_type=jnp.float32)

    @pl.when(k == pl.num_programs(1) - 1)
    def _finalize():
        o_ref[...] = acc_ref[...].astype(o_ref.dtype)


def mlp_pallas(x, w1, b1, w2, b2, *, tm=512, th=512, out_dtype=None,
               approximate_gelu=False):
    """x: [M, C]; w1: [C, H]; b1: [1, H]; w2: [H, C]; b2: [1, C] -> [M, C]."""
    M, C = x.shape
    H = w1.shape[1]
    out_dtype = jnp.dtype(out_dtype if out_dtype is not None else x.dtype)

    tm, th, C_pad, H_pad = _choose_tiles(M, C, H, tm, th)

    x_it = jnp.dtype(x.dtype).itemsize
    w_it = jnp.dtype(w1.dtype).itemsize
    b1_it = jnp.dtype(b1.dtype).itemsize
    b2_it = jnp.dtype(b2.dtype).itemsize
    o_it = out_dtype.itemsize

    budget = _vmem_budget_bytes()

    def footprint(resident, tm_, th_):
        base = (2 * tm_ * C_pad * x_it          # x tile (double-buffered)
                + 2 * 8 * H_pad * b1_it         # b1 resident (sublane-padded)
                + 2 * 8 * C_pad * b2_it         # b2 resident
                + 2 * tm_ * C_pad * o_it        # out tile
                + tm_ * C_pad * 4)              # f32 accumulator scratch
        if resident:
            w = 2 * (C_pad * H_pad + H_pad * C_pad) * w_it   # full W1 + W2
        else:
            w = 2 * (C_pad * th_ + th_ * C_pad) * w_it       # streamed chunks
        return base + w

    resident = footprint(True, tm, th) * 5 // 4 <= budget
    if not resident:
        # Shrink streamed tiles until the footprint fits the budget.
        while footprint(False, tm, th) * 5 // 4 > budget:
            if th > 128:
                th = max(128, (th // 2) // 128 * 128)
                while H_pad % th:
                    th -= 128
            elif tm > 64:
                tm = _round_up(max(8, tm // 2), 8)
            else:
                break
    M_pad = _round_up(M, tm)

    est = footprint(resident, tm, th)
    vmem_limit = int(min(max(est * 5 // 4 + (2 << 20), 16 << 20), budget))

    # Zero padding is exact: padded x cols hit zero W1 rows; padded hidden cols have
    # zero W2 rows; padded output cols come from zero W2 cols / b2 and are sliced off.
    x_p = jnp.pad(x, ((0, M_pad - M), (0, C_pad - C)))
    w1_p = jnp.pad(w1, ((0, C_pad - C), (0, H_pad - H)))
    b1_p = jnp.pad(b1, ((0, 0), (0, H_pad - H)))
    w2_p = jnp.pad(w2, ((0, H_pad - H), (0, C_pad - C)))
    b2_p = jnp.pad(b2, ((0, 0), (0, C_pad - C)))

    grid = (M_pad // tm, H_pad // th)

    if resident:
        w1_spec = pl.BlockSpec((C_pad, H_pad), lambda i, k: (0, 0))   # VMEM-resident
        w2_spec = pl.BlockSpec((H_pad, C_pad), lambda i, k: (0, 0))   # VMEM-resident
    else:
        w1_spec = pl.BlockSpec((C_pad, th), lambda i, k: (0, k))      # streamed chunk
        w2_spec = pl.BlockSpec((th, C_pad), lambda i, k: (k, 0))      # streamed chunk

    kernel = functools.partial(_mlp_kernel, th=th, resident=resident,
                               approximate=approximate_gelu)

    out = pl.pallas_call(
        kernel,
        out_shape=jax.ShapeDtypeStruct((M_pad, C_pad), out_dtype),
        grid_spec=pltpu.PrefetchScalarGridSpec(
            num_scalar_prefetch=0,
            grid=grid,
            in_specs=[
                pl.BlockSpec((tm, C_pad), lambda i, k: (i, 0)),   # x row tile
                w1_spec,                                          # W1
                pl.BlockSpec((1, H_pad), lambda i, k: (0, 0)),    # b1 (invariant)
                w2_spec,                                          # W2
                pl.BlockSpec((1, C_pad), lambda i, k: (0, 0)),    # b2 (invariant)
            ],
            out_specs=pl.BlockSpec((tm, C_pad), lambda i, k: (i, 0)),
            scratch_shapes=[pltpu.VMEM((tm, C_pad), jnp.float32)],
        ),
        compiler_params=pltpu.CompilerParams(
            dimension_semantics=("parallel", "arbitrary"),
            vmem_limit_bytes=vmem_limit,
        ),
    )(x_p, w1_p, b1_p, w2_p, b2_p)

    return out[:M, :C]


def mlp_forward(x_bnc, w1, b1, w2, b2, *, compute_dtype=jnp.bfloat16,
                tm=512, th=512, approximate_gelu=False):
    """x_bnc: [B, N, C] -> [B, N, C].  Dropout / DropPath are identity (drop=0).

    compute_dtype=bf16 (default) casts x and the weights for MXU throughput / half
    the weight DMA bytes while keeping f32 accumulation and f32 GELU in the kernel.
    Pass compute_dtype=None for an exact end-to-end f32 path.
    """
    B, N, C = x_bnc.shape
    out_dtype = x_bnc.dtype
    x2d = x_bnc.reshape(B * N, C)
    if compute_dtype is not None:
        x2d = x2d.astype(compute_dtype)
        w1 = w1.astype(compute_dtype)
        w2 = w2.astype(compute_dtype)
        # Biases keep their (f32) dtype; they are added in f32 inside the kernel.
    out2d = mlp_pallas(x2d, w1, b1, w2, b2, tm=tm, th=th, out_dtype=out_dtype,
                       approximate_gelu=approximate_gelu)
    return out2d.reshape(B, N, C)


def _reference(x_bnc, w1, b1, w2, b2):
    h = jnp.einsum("bnc,ch->bnh", x_bnc, w1) + b1[0]
    h = 0.5 * h * (1.0 + lax.erf(h / jnp.sqrt(2.0)))
    return jnp.einsum("bnh,hc->bnc", h, w2) + b2[0]


if __name__ == "__main__":
    # Small shapes consistent with the module: tokens [B, N, in_features].
    B, N = 2, 8
    in_features, hidden_features = 32, 64

    key = jax.random.PRNGKey(0)
    kx, k1, k2, k3, k4 = jax.random.split(key, 5)

    x = jax.random.normal(kx, (B, N, in_features), dtype=jnp.float32)

    # Deterministic parameter init (Kaiming-uniform-like bound, as in nn.Linear).
    bound1 = 1.0 / math.sqrt(in_features)
    bound2 = 1.0 / math.sqrt(hidden_features)
    w1 = jax.random.uniform(k1, (in_features, hidden_features), jnp.float32,
                            -bound1, bound1)
    b1 = jax.random.uniform(k2, (1, hidden_features), jnp.float32, -bound1, bound1)
    w2 = jax.random.uniform(k3, (hidden_features, in_features), jnp.float32,
                            -bound2, bound2)
    b2 = jax.random.uniform(k4, (1, in_features), jnp.float32, -bound2, bound2)

    ref = _reference(x, w1, b1, w2, b2)

    # Exact f32 path (matches torch.nn.GELU() numerics).
    out_f32 = jax.block_until_ready(
        mlp_forward(x, w1, b1, w2, b2, compute_dtype=None))
    assert out_f32.shape == (B, N, in_features)
    assert jnp.allclose(out_f32, ref, atol=1e-5, rtol=1e-5), "f32 mismatch vs reference"

    # Default production path: bf16 operands, f32 accumulation.
    out_bf16 = jax.block_until_ready(mlp_forward(x, w1, b1, w2, b2))
    assert out_bf16.shape == (B, N, in_features)
    assert jnp.allclose(out_bf16, ref, atol=5e-2, rtol=5e-2), "bf16 mismatch vs reference"

    print("KERNEL_OK")
</pallas_src>

<mosaic_0001>
module attributes {stable_mosaic.version = 11 : i64} {
  func.func @_mlp_kernel(%arg0: i32, %arg1: i32, %arg2: memref<16x128xf32, #tpu.memory_space<vmem>>, %arg3: memref<128x128xf32, #tpu.memory_space<vmem>>, %arg4: memref<1x128xf32, #tpu.memory_space<vmem>>, %arg5: memref<128x128xf32, #tpu.memory_space<vmem>>, %arg6: memref<1x128xf32, #tpu.memory_space<vmem>>, %arg7: memref<16x128xf32, #tpu.memory_space<vmem>>, %arg8: memref<16x128xf32, #tpu.memory_space<vmem>>) attributes {dimension_semantics = [#tpu.dimension_semantics<parallel>, #tpu.dimension_semantics<arbitrary>], iteration_bounds = array<i64: 1, 1>, scalar_prefetch = 0 : i64, scratch_operands = 1 : i64, tpu.core_type = #tpu.core_type<tc>, window_params = [{transform_indices = @transform_0, window_bounds = array<i64: 16, 128>}, {pipeline_mode = #tpu.pipeline_mode<synchronous>, transform_indices = @transform_1, window_bounds = array<i64: 128, 128>}, {pipeline_mode = #tpu.pipeline_mode<synchronous>, transform_indices = @transform_2, window_bounds = array<i64: 1, 128>}, {pipeline_mode = #tpu.pipeline_mode<synchronous>, transform_indices = @transform_3, window_bounds = array<i64: 128, 128>}, {pipeline_mode = #tpu.pipeline_mode<synchronous>, transform_indices = @transform_4, window_bounds = array<i64: 1, 128>}, {transform_indices = @transform_5, window_bounds = array<i64: 16, 128>}]} {
    %c0_i32 = arith.constant 0 : i32
    %0 = arith.cmpi eq, %arg1, %c0_i32 : i32
    %1 = arith.extui %0 : i1 to i32
    %c0_i32_0 = arith.constant 0 : i32
    %2 = arith.cmpi ne, %1, %c0_i32_0 : i32
    scf.if %2 {
      %c0_15 = arith.constant 0 : index
      %c0_16 = arith.constant 0 : index
      %30 = vector.load %arg6[%c0_15, %c0_16] : memref<1x128xf32, #tpu.memory_space<vmem>>, vector<1x128xf32>
      %31 = vector.shape_cast %30 : vector<1x128xf32> to vector<1x128xf32>
      %32 = vector.broadcast %31 : vector<1x128xf32> to vector<16x128xf32>
      %c0_17 = arith.constant 0 : index
      %c0_18 = arith.constant 0 : index
      %33 = vector.load %arg8[%c0_17, %c0_18] : memref<16x128xf32, #tpu.memory_space<vmem>>, vector<16x128xf32>
      tpu.vector_store %arg8[%c0_17, %c0_18], %32 {strides = array<i32>} : memref<16x128xf32, #tpu.memory_space<vmem>>, vector<16x128xf32>,
    } else {
    }
    %c128_i32 = arith.constant 128 : i32
    %3 = arith.muli %arg1, %c128_i32 : i32
    %4 = tpu.assume_multiple %3, 128 : i32
    %c0 = arith.constant 0 : index
    %5 = arith.index_cast %4 : i32 to index
    %6 = vector.load %arg3[%c0, %5] : memref<128x128xf32, #tpu.memory_space<vmem>>, vector<128x128xf32>
    %7 = arith.index_cast %4 : i32 to index
    %c0_1 = arith.constant 0 : index
    %8 = vector.load %arg5[%7, %c0_1] : memref<128x128xf32, #tpu.memory_space<vmem>>, vector<128x128xf32>
    %c0_2 = arith.constant 0 : index
    %9 = arith.index_cast %4 : i32 to index
    %10 = vector.load %arg4[%c0_2, %9] : memref<1x128xf32, #tpu.memory_space<vmem>>, vector<1x128xf32>
    %c0_3 = arith.constant 0 : index
    %c0_4 = arith.constant 0 : index
    %11 = vector.load %arg2[%c0_3, %c0_4] : memref<16x128xf32, #tpu.memory_space<vmem>>, vector<16x128xf32>
    %cst = arith.constant dense<0.000000e+00> : vector<16x128xf32>
    %12 = tpu.matmul %11, %6, %cst {dimension_numbers = #tpu.dot_dimension_numbers<[1], [0], [0], [1], [0, 0, 1, 1], [], []>} : vector<16x128xf32>, vector<128x128xf32>, vector<16x128xf32> -> vector<16x128xf32>
    %13 = vector.broadcast %10 : vector<1x128xf32> to vector<16x128xf32>
    %14 = arith.addf %12, %13 : vector<16x128xf32>
    %cst_5 = arith.constant 5.000000e-01 : f32
    %15 = vector.broadcast %cst_5 : f32 to vector<16x128xf32>
    %16 = arith.mulf %15, %14 : vector<16x128xf32>
    %cst_6 = arith.constant 0.707106769 : f32
    %17 = vector.broadcast %cst_6 : f32 to vector<16x128xf32>
    %18 = arith.mulf %14, %17 : vector<16x128xf32>
    %19 = math.erf %18 : vector<16x128xf32>
    %cst_7 = arith.constant 1.000000e+00 : f32
    %20 = vector.broadcast %cst_7 : f32 to vector<16x128xf32>
    %21 = arith.addf %20, %19 : vector<16x128xf32>
    %22 = arith.mulf %16, %21 : vector<16x128xf32>
    %c0_8 = arith.constant 0 : index
    %c0_9 = arith.constant 0 : index
    %23 = vector.load %arg8[%c0_8, %c0_9] : memref<16x128xf32, #tpu.memory_space<vmem>>, vector<16x128xf32>
    %cst_10 = arith.constant dense<0.000000e+00> : vector<16x128xf32>
    %24 = tpu.matmul %22, %8, %cst_10 {dimension_numbers = #tpu.dot_dimension_numbers<[1], [0], [0], [1], [0, 0, 1, 1], [], []>} : vector<16x128xf32>, vector<128x128xf32>, vector<16x128xf32> -> vector<16x128xf32>
    %25 = arith.addf %23, %24 : vector<16x128xf32>
    %c0_11 = arith.constant 0 : index
    %c0_12 = arith.constant 0 : index
    %26 = vector.load %arg8[%c0_11, %c0_12] : memref<16x128xf32, #tpu.memory_space<vmem>>, vector<16x128xf32>
    tpu.vector_store %arg8[%c0_11, %c0_12], %25 {strides = array<i32>} : memref<16x128xf32, #tpu.memory_space<vmem>>, vector<16x128xf32>,
    %c0_i32_13 = arith.constant 0 : i32
    %27 = arith.cmpi eq, %arg1, %c0_i32_13 : i32
    %28 = arith.extui %27 : i1 to i32
    %c0_i32_14 = arith.constant 0 : i32
    %29 = arith.cmpi ne, %28, %c0_i32_14 : i32
    scf.if %29 {
      %c0_15 = arith.constant 0 : index
      %c0_16 = arith.constant 0 : index
      %30 = vector.load %arg8[%c0_15, %c0_16] : memref<16x128xf32, #tpu.memory_space<vmem>>, vector<16x128xf32>
      %c0_17 = arith.constant 0 : index
      %c0_18 = arith.constant 0 : index
      %31 = vector.load %arg7[%c0_17, %c0_18] : memref<16x128xf32, #tpu.memory_space<vmem>>, vector<16x128xf32>
      tpu.vector_store %arg7[%c0_17, %c0_18], %30 {strides = array<i32>} : memref<16x128xf32, #tpu.memory_space<vmem>>, vector<16x128xf32>,
    } else {
    }
    return
  }
  func.func @transform_0(%arg0: i32, %arg1: i32) -> (i32, i32) {
    %c0_i32 = arith.constant 0 : i32
    %c0_i32_0 = arith.constant 0 : i32
    return %arg0, %c0_i32 : i32, i32
  }
  func.func @transform_1(%arg0: i32, %arg1: i32) -> (i32, i32) {
    %c0_i32 = arith.constant 0 : i32
    %c0_i32_0 = arith.constant 0 : i32
    %c0_i32_1 = arith.constant 0 : i32
    return %c0_i32, %c0_i32_0 : i32, i32
  }
  func.func @transform_2(%arg0: i32, %arg1: i32) -> (i32, i32) {
    %c0_i32 = arith.constant 0 : i32
    %c0_i32_0 = arith.constant 0 : i32
    %c0_i32_1 = arith.constant 0 : i32
    return %c0_i32, %c0_i32_0 : i32, i32
  }
  func.func @transform_3(%arg0: i32, %arg1: i32) -> (i32, i32) {
    %c0_i32 = arith.constant 0 : i32
    %c0_i32_0 = arith.constant 0 : i32
    %c0_i32_1 = arith.constant 0 : i32
    return %c0_i32, %c0_i32_0 : i32, i32
  }
  func.func @transform_4(%arg0: i32, %arg1: i32) -> (i32, i32) {
    %c0_i32 = arith.constant 0 : i32
    %c0_i32_0 = arith.constant 0 : i32
    %c0_i32_1 = arith.constant 0 : i32
    return %c0_i32, %c0_i32_0 : i32, i32
  }
  func.func @transform_5(%arg0: i32, %arg1: i32) -> (i32, i32) {
    %c0_i32 = arith.constant 0 : i32
    %c0_i32_0 = arith.constant 0 : i32
    return %arg0, %c0_i32 : i32, i32
  }
}

</mosaic_0001>

<llo_original>
// kernel: tpu_custom_call.1
$region0: #{tpu_custom_call.1}
  #allocation0 [shape = 'u32[]', space=smem, size = 0x4, offset = 0x4, fixed_abs, tag = 'smem constant byte address 0x4 - core index']
  #allocation1 [shape = 'u32[144,128]{1,0:T(1,128)}', space=vmem, size = 0x12000, scoped, tag = 'internal scratch']
  #allocation2 [shape = 'f32[16,128]{1,0:T(8,128)}', space=vmem, size = 0x2000, scoped, tag = 'scratch operand']
  %s0 = inlined_call_operand.hbm [shape: f32[16,128], index: 0, kind: input, shape index: {}]
  %s1 = inlined_call_operand.hbm [shape: f32[128,128], index: 1, kind: input, shape index: {}]
  %s2 = inlined_call_operand.vmem [shape: f32[1,128], index: 2, kind: input, shape index: {}]
  %s3 = inlined_call_operand.hbm [shape: f32[128,128], index: 3, kind: input, shape index: {}]
  %s4 = inlined_call_operand.vmem [shape: f32[1,128], index: 4, kind: input, shape index: {}]
  %s5 = inlined_call_operand.hbm [shape: f32[16,128], index: 5, kind: output, shape index: {}]
  %s6 = sld [smem:[#allocation0]]
  $region50: #{tpu_custom_call.1} parent=0
    _
  %s8 = ssub.s32 1, %s6
  %s9 = scalar_select 0, %s8, %s6
  $region1: #{tpu_custom_call.1} parent=0
    #allocation3 [shape = 'u8[8192]{0}', space=vmem, size = 0x2000, scoped, tag = 'input window, operand 0, single buffered']
    #allocation4 [shape = 's32[1]{0}', space=sflag, size = 0x4, scoped, tag = 'scoped memory for tpu_custom_call.1']
    #allocation5 [shape = 's32[1]{0}', space=sflag, size = 0x4, scoped, tag = 'scoped memory for tpu_custom_call.1']
    #allocation6 [shape = 'u8[65536]{0}', space=vmem, size = 0x10000, scoped, tag = 'input window, operand 1, single buffered']
    #allocation7 [shape = 's32[1]{0}', space=sflag, size = 0x4, scoped, tag = 'scoped memory for tpu_custom_call.1']
    #allocation8 [shape = 'u8[65536]{0}', space=vmem, size = 0x10000, scoped, tag = 'input window, operand 3, single buffered']
    #allocation9 [shape = 'u8[8192]{0}', space=vmem, size = 0x2000, scoped, tag = 'output window, operand 0, single buffered']
    %10 = vsyncpa [#allocation4], 0
    %11 = vsyncpa [#allocation7], 0
    %12 = vsyncpa [#allocation5], 0
    // Predicated region
    $region2: #{tpu_custom_call.1} parent=1 // pred_check
      _
    $region3: #{tpu_custom_call.1} parent=1 // pred_check_branch
      %14 = sbr.rel (0) target = $region5
    $region4: #{tpu_custom_call.1} parent=1 // pred_region
      %s16 = ssub.s32 256, 256
      %17 = vsyncadd [#allocation4], %s16
      %s18 = sshll.u32 [#allocation3], 4
      %s19 = int_to_ptr.vmem [resolvable:$true] %s18
      %24 = dma.hbm_to_vmem [thread:$0]  %s0, 256, %s19, [#allocation4], 128, 128, 8
    $region5: #{tpu_custom_call.1} parent=1 // pred_fallthru
      _
    // Predicated region
    $region6: #{tpu_custom_call.1} parent=1 // pred_check
      _
    $region7: #{tpu_custom_call.1} parent=1 // pred_check_branch
      %26 = sbr.rel (0) target = $region9
    $region8: #{tpu_custom_call.1} parent=1 // pred_region
      %s28 = ssub.s32 2048, 2048
      %29 = vsyncadd [#allocation7], %s28
      %s30 = sshll.u32 [#allocation6], 4
      %s31 = int_to_ptr.vmem [resolvable:$true] %s30
      %36 = dma.hbm_to_vmem [thread:$0]  %s1, 2048, %s31, [#allocation7], 128, 128, 8
    $region9: #{tpu_custom_call.1} parent=1 // pred_fallthru
      _
    // Predicated region
    $region10: #{tpu_custom_call.1} parent=1 // pred_check
      _
    $region11: #{tpu_custom_call.1} parent=1 // pred_check_branch
      %38 = sbr.rel (0) target = $region13
    $region12: #{tpu_custom_call.1} parent=1 // pred_region
      _
    $region13: #{tpu_custom_call.1} parent=1 // pred_fallthru
      _
    // Predicated region
    $region14: #{tpu_custom_call.1} parent=1 // pred_check
      _
    $region15: #{tpu_custom_call.1} parent=1 // pred_check_branch
      %40 = sbr.rel (0) target = $region17
    $region16: #{tpu_custom_call.1} parent=1 // pred_region
      %s42 = ssub.s32 2048, 2048
      %43 = vsyncadd [#allocation7], %s42
      %s44 = sshll.u32 [#allocation8], 4
      %s45 = int_to_ptr.vmem [resolvable:$true] %s44
      %50 = dma.hbm_to_vmem [thread:$0]  %s3, 2048, %s45, [#allocation7], 128, 128, 8
    $region17: #{tpu_custom_call.1} parent=1 // pred_fallthru
      _
    // Predicated region
    $region18: #{tpu_custom_call.1} parent=1 // pred_check
      _
    $region19: #{tpu_custom_call.1} parent=1 // pred_check_branch
      %52 = sbr.rel (0) target = $region21
    $region20: #{tpu_custom_call.1} parent=1 // pred_region
      _
    $region21: #{tpu_custom_call.1} parent=1 // pred_fallthru
      _
    // Predicated region
    $region22: #{tpu_custom_call.1} parent=1 // pred_check
      _
    $region23: #{tpu_custom_call.1} parent=1 // pred_check_branch
      %54 = sbr.rel (0) target = $region25
    $region24: #{tpu_custom_call.1} parent=1 // pred_region
      %55 = dma.done [#allocation4], 256
    $region25: #{tpu_custom_call.1} parent=1 // pred_fallthru
      _
    // Predicated region
    $region26: #{tpu_custom_call.1} parent=1 // pred_check
      _
    $region27: #{tpu_custom_call.1} parent=1 // pred_check_branch
      %57 = sbr.rel (0) target = $region29
    $region28: #{tpu_custom_call.1} parent=1 // pred_region
      %58 = dma.done [#allocation7], 2048
    $region29: #{tpu_custom_call.1} parent=1 // pred_fallthru
      _
    // Predicated region
    $region30: #{tpu_custom_call.1} parent=1 // pred_check
      _
    $region31: #{tpu_custom_call.1} parent=1 // pred_check_branch
      %60 = sbr.rel (0) target = $region33
    $region32: #{tpu_custom_call.1} parent=1 // pred_region
      %61 = dma.done [#allocation7], 2048
    $region33: #{tpu_custom_call.1} parent=1 // pred_fallthru
      _
    %p62 = scmp.eq.s32.totalorder 0, 0
    // Predicated region
    $region34: #{tpu_custom_call.1} parent=1 // pred_check
      %p63 = pneg %p62
    $region35: #{tpu_custom_call.1} parent=1 // pred_check_branch
      %65 = sbr.rel (%p63) target = $region37
    $region36: #{tpu_custom_call.1} parent=1 // pred_region
      %v66 = vld [vmem:[%s4] sm:$0x1]
      %v68 = vlaneseq
      %v69 = vshrl.u32 %v68, 7
      %v70 = vsub.s32 0, %v69
      %v71 = vrot.slane %v66, %v70
      %73 = vst [vmem:[#allocation2] sm:$0xff] %v71
      %74 = vst [vmem:[#allocation2 + $0x8] sm:$0xff] %v71
    $region37: #{tpu_custom_call.1} parent=1 // pred_fallthru
      _
    %s75 = smul.u32 0, 128
    %s76 = sshra.s32 %s75, 7
    %s77 = sand.u32 %s75, 127
    %s78 = scalar_lea.vmem [#allocation6], %s76
    %v79 = vld [vmem:[%s78] sm:$0xff]
    %v80 = vld [vmem:[%s78 + $0x8] sm:$0xff]
    %v81 = vld [vmem:[%s78 + $0x10] sm:$0xff]
    %v82 = vld [vmem:[%s78 + $0x18] sm:$0xff]
    %v83 = vld [vmem:[%s78 + $0x20] sm:$0xff]
    %v84 = vld [vmem:[%s78 + $0x28] sm:$0xff]
    %v85 = vld [vmem:[%s78 + $0x30] sm:$0xff]
    %v86 = vld [vmem:[%s78 + $0x38] sm:$0xff]
    %v87 = vld [vmem:[%s78 + $0x40] sm:$0xff]
    %v88 = vld [vmem:[%s78 + $0x48] sm:$0xff]
    %v89 = vld [vmem:[%s78 + $0x50] sm:$0xff]
    %v90 = vld [vmem:[%s78 + $0x58] sm:$0xff]
    %v91 = vld [vmem:[%s78 + $0x60] sm:$0xff]
    %v92 = vld [vmem:[%s78 + $0x68] sm:$0xff]
    %v93 = vld [vmem:[%s78 + $0x70] sm:$0xff]
    %v94 = vld [vmem:[%s78 + $0x78] sm:$0xff]
    %s95 = scalar_lea.vmem [#allocation8], %s75
    %v96 = vld [vmem:[%s95] sm:$0xff]
    %v97 = vld [vmem:[%s95 + $0x8] sm:$0xff]
    %v98 = vld [vmem:[%s95 + $0x10] sm:$0xff]
    %v99 = vld [vmem:[%s95 + $0x18] sm:$0xff]
    %v100 = vld [vmem:[%s95 + $0x20] sm:$0xff]
    %v101 = vld [vmem:[%s95 + $0x28] sm:$0xff]
    %v102 = vld [vmem:[%s95 + $0x30] sm:$0xff]
    %v103 = vld [vmem:[%s95 + $0x38] sm:$0xff]
    %v104 = vld [vmem:[%s95 + $0x40] sm:$0xff]
    %v105 = vld [vmem:[%s95 + $0x48] sm:$0xff]
    %v106 = vld [vmem:[%s95 + $0x50] sm:$0xff]
    %v107 = vld [vmem:[%s95 + $0x58] sm:$0xff]
    %v108 = vld [vmem:[%s95 + $0x60] sm:$0xff]
    %v109 = vld [vmem:[%s95 + $0x68] sm:$0xff]
    %v110 = vld [vmem:[%s95 + $0x70] sm:$0xff]
    %v111 = vld [vmem:[%s95 + $0x78] sm:$0xff]
    %s112 = scalar_lea.vmem %s2, %s76
    %v113 = vld [vmem:[%s112] sm:$0x1]
    %v114 = vld [vmem:[#allocation3] sm:$0xff]
    %v115 = vld [vmem:[#allocation3 + $0x8] sm:$0xff]
    %v117 = vlaneseq
    %v118 = vshrl.u32 %v117, 7
    %v119 = vsub.s32 0, %v118
    %v120 = vrot.slane %v113, %v119
    %122 = vmatprep.subr.mxu0 0.0
    %123 = vmatpush1.msra.mxu0 %v94
    %124 = vmatprep.subr.mxu0 0.0
    %125 = vmatpush1.msra.mxu0 %v93
    %126 = vmatprep.subr.mxu0 0.0
    %127 = vmatpush1.msra.mxu0 %v92
    %128 = vmatprep.subr.mxu0 0.0
    %129 = vmatpush1.msra.mxu0 %v91
    %130 = vmatprep.subr.mxu0 0.0
    %131 = vmatpush1.msra.mxu0 %v90
    %132 = vmatprep.subr.mxu0 0.0
    %133 = vmatpush1.msra.mxu0 %v89
    %134 = vmatprep.subr.mxu0 0.0
    %135 = vmatpush1.msra.mxu0 %v88
    %136 = vmatprep.subr.mxu0 0.0
    %137 = vmatpush1.msra.mxu0 %v87
    %138 = vmatprep.subr.mxu0 0.0
    %139 = vmatpush1.msra.mxu0 %v86
    %140 = vmatprep.subr.mxu0 0.0
    %141 = vmatpush1.msra.mxu0 %v85
    %142 = vmatprep.subr.mxu0 0.0
    %143 = vmatpush1.msra.mxu0 %v84
    %144 = vmatprep.subr.mxu0 0.0
    %145 = vmatpush1.msra.mxu0 %v83
    %146 = vmatprep.subr.mxu0 0.0
    %147 = vmatpush1.msra.mxu0 %v82
    %148 = vmatprep.subr.mxu0 0.0
    %149 = vmatpush1.msra.mxu0 %v81
    %150 = vmatprep.subr.mxu0 0.0
    %151 = vmatpush1.msra.mxu0 %v80
    %152 = vmatprep.subr.mxu0 0.0
    %153 = vmatpush1.msra.mxu0 %v79
    %154 = vmatprep.subr.mxu0 0.0
    %155 = vmatpush2.msra.mxu0 0.0
    %156 = vmatprep.subr.mxu0 0.0
    %157 = vmatpush2.msra.mxu0 0.0
    %158 = vmatprep.subr.mxu0 0.0
    %159 = vmatpush2.msra.mxu0 0.0
    %160 = vmatprep.subr.mxu0 0.0
    %161 = vmatpush2.msra.mxu0 0.0
    %162 = vmatprep.subr.mxu0 0.0
    %163 = vmatpush2.msra.mxu0 0.0
    %164 = vmatprep.subr.mxu0 0.0
    %165 = vmatpush2.msra.mxu0 0.0
    %166 = vmatprep.subr.mxu0 0.0
    %167 = vmatpush2.msra.mxu0 0.0
    %168 = vmatprep.subr.mxu0 0.0
    %169 = vmatpush2.msra.mxu0 0.0
    %170 = vmatprep.subr.mxu0 0.0
    %171 = vmatpush2.msra.mxu0 0.0
    %172 = vmatprep.subr.mxu0 0.0
    %173 = vmatpush2.msra.mxu0 0.0
    %174 = vmatprep.subr.mxu0 0.0
    %175 = vmatpush2.msra.mxu0 0.0
    %176 = vmatprep.subr.mxu0 0.0
    %177 = vmatpush2.msra.mxu0 0.0
    %178 = vmatprep.subr.mxu0 0.0
    %179 = vmatpush2.msra.mxu0 0.0
    %180 = vmatprep.subr.mxu0 0.0
    %181 = vmatpush2.msra.mxu0 0.0
    %182 = vmatprep.subr.mxu0 0.0
    %183 = vmatpush2.msra.mxu0 0.0
    %184 = vmatprep.subr.mxu0 0.0
    %185 = vmatpush2.msra.mxu0 0.0
    %186 = vmatprep.mubr.f32.mxu0 0.0
    %187 = vmatmul.mubr.f32.gmra.mxu0 %v114
    %v188 = vpop.f32.mrf.mxu0
    %v189 = vadd.f32 %v120, %v188
    %v190 = vpop.f32.mrf.mxu0
    %191 = vmatprep.mubr.f32.mxu0 0.0
    %192 = vmatmul.mubr.f32.gmra.mxu0 %v115
    %v193 = vpop.f32.mrf.mxu0
    %v194 = vadd.f32 %v120, %v193
    %v195 = vpop.f32.mrf.mxu0
    %196 = vdwg.mxu0
    %v197 = vmul.f32 %v189, 0.5
    %v198 = vmul.f32 %v194, 0.5
    %v199 = vmul.f32 %v189, 0.70710677
    %v200 = vmul.f32 %v194, 0.70710677
    %v201 = verf.f32.pop %v199
    %v202 = verf.f32.pop %v200
    %v203 = vadd.f32 %v201, 1.0
    %v204 = vadd.f32 %v202, 1.0
    %v205 = vmul.f32 %v197, %v203
    %v206 = vmul.f32 %v198, %v204
    %v207 = vld [vmem:[#allocation2] sm:$0xff]
    %v208 = vld [vmem:[#allocation2 + $0x8] sm:$0xff]
    %209 = vmatprep.subr.mxu0 0.0
    %210 = vmatpush1.msra.mxu0 %v111
    %211 = vmatprep.subr.mxu0 0.0
    %212 = vmatpush1.msra.mxu0 %v110
    %213 = vmatprep.subr.mxu0 0.0
    %214 = vmatpush1.msra.mxu0 %v109
    %215 = vmatprep.subr.mxu0 0.0
    %216 = vmatpush1.msra.mxu0 %v108
    %217 = vmatprep.subr.mxu0 0.0
    %218 = vmatpush1.msra.mxu0 %v107
    %219 = vmatprep.subr.mxu0 0.0
    %220 = vmatpush1.msra.mxu0 %v106
    %221 = vmatprep.subr.mxu0 0.0
    %222 = vmatpush1.msra.mxu0 %v105
    %223 = vmatprep.subr.mxu0 0.0
    %224 = vmatpush1.msra.mxu0 %v104
    %225 = vmatprep.subr.mxu0 0.0
    %226 = vmatpush1.msra.mxu0 %v103
    %227 = vmatprep.subr.mxu0 0.0
    %228 = vmatpush1.msra.mxu0 %v102
    %229 = vmatprep.subr.mxu0 0.0
    %230 = vmatpush1.msra.mxu0 %v101
    %231 = vmatprep.subr.mxu0 0.0
    %232 = vmatpush1.msra.mxu0 %v100
    %233 = vmatprep.subr.mxu0 0.0
    %234 = vmatpush1.msra.mxu0 %v99
    %235 = vmatprep.subr.mxu0 0.0
    %236 = vmatpush1.msra.mxu0 %v98
    %237 = vmatprep.subr.mxu0 0.0
    %238 = vmatpush1.msra.mxu0 %v97
    %239 = vmatprep.subr.mxu0 0.0
    %240 = vmatpush1.msra.mxu0 %v96
    %241 = vmatprep.subr.mxu0 0.0
    %242 = vmatpush2.msra.mxu0 0.0
    %243 = vmatprep.subr.mxu0 0.0
    %244 = vmatpush2.msra.mxu0 0.0
    %245 = vmatprep.subr.mxu0 0.0
    %246 = vmatpush2.msra.mxu0 0.0
    %247 = vmatprep.subr.mxu0 0.0
    %248 = vmatpush2.msra.mxu0 0.0
    %249 = vmatprep.subr.mxu0 0.0
    %250 = vmatpush2.msra.mxu0 0.0
    %251 = vmatprep.subr.mxu0 0.0
    %252 = vmatpush2.msra.mxu0 0.0
    %253 = vmatprep.subr.mxu0 0.0
    %254 = vmatpush2.msra.mxu0 0.0
    %255 = vmatprep.subr.mxu0 0.0
    %256 = vmatpush2.msra.mxu0 0.0
    %257 = vmatprep.subr.mxu0 0.0
    %258 = vmatpush2.msra.mxu0 0.0
    %259 = vmatprep.subr.mxu0 0.0
    %260 = vmatpush2.msra.mxu0 0.0
    %261 = vmatprep.subr.mxu0 0.0
    %262 = vmatpush2.msra.mxu0 0.0
    %263 = vmatprep.subr.mxu0 0.0
    %264 = vmatpush2.msra.mxu0 0.0
    %265 = vmatprep.subr.mxu0 0.0
    %266 = vmatpush2.msra.mxu0 0.0
    %267 = vmatprep.subr.mxu0 0.0
    %268 = vmatpush2.msra.mxu0 0.0
    %269 = vmatprep.subr.mxu0 0.0
    %270 = vmatpush2.msra.mxu0 0.0
    %271 = vmatprep.subr.mxu0 0.0
    %272 = vmatpush2.msra.mxu0 0.0
    %273 = vmatprep.mubr.f32.mxu0 0.0
    %274 = vmatmul.mubr.f32.gmra.mxu0 %v205
    %v275 = vpop.f32.mrf.mxu0
    %v276 = vadd.f32 0.0, %v275
    %v277 = vpop.f32.mrf.mxu0
    %278 = vmatprep.mubr.f32.mxu0 0.0
    %279 = vmatmul.mubr.f32.gmra.mxu0 %v206
    %v280 = vpop.f32.mrf.mxu0
    %v281 = vadd.f32 0.0, %v280
    %v282 = vpop.f32.mrf.mxu0
    %283 = vdwg.mxu0
    %v284 = vadd.f32 %v207, %v276
    %v285 = vadd.f32 %v208, %v281
    %286 = vst [vmem:[#allocation2] sm:$0xff] %v284
    %287 = vst [vmem:[#allocation2 + $0x8] sm:$0xff] %v285
    // Predicated region
    $region38: #{tpu_custom_call.1} parent=1 // pred_check
      %p288 = pneg %p62
    $region39: #{tpu_custom_call.1} parent=1 // pred_check_branch
      %290 = sbr.rel (%p288) target = $region41
    $region40: #{tpu_custom_call.1} parent=1 // pred_region
      %v291 = vld [vmem:[#allocation2] sm:$0xff]
      %v292 = vld [vmem:[#allocation2 + $0x8] sm:$0xff]
      %293 = vst [vmem:[#allocation9] sm:$0xff] %v291
      %294 = vst [vmem:[#allocation9 + $0x8] sm:$0xff] %v292
    $region41: #{tpu_custom_call.1} parent=1 // pred_fallthru
      _
    // Predicated region
    $region42: #{tpu_custom_call.1} parent=1 // pred_check
      _
    $region43: #{tpu_custom_call.1} parent=1 // pred_check_branch
      %296 = sbr.rel (0) target = $region45
    $region44: #{tpu_custom_call.1} parent=1 // pred_region
      %s298 = ssub.s32 256, 256
      %299 = vsyncadd [#allocation5], %s298
      %s300 = sshll.u32 [#allocation9], 4
      %s301 = int_to_ptr.vmem [resolvable:$true] %s300
      %306 = dma.vmem_to_hbm [thread:$0]  %s301, 256, %s5, [#allocation5], 128, 128, 8
    $region45: #{tpu_custom_call.1} parent=1 // pred_fallthru
      _
    // Predicated region
    $region46: #{tpu_custom_call.1} parent=1 // pred_check
      _
    $region47: #{tpu_custom_call.1} parent=1 // pred_check_branch
      %308 = sbr.rel (0) target = $region49
    $region48: #{tpu_custom_call.1} parent=1 // pred_region
      %309 = dma.done [#allocation5], 256
    $region49: #{tpu_custom_call.1} parent=1 // pred_fallthru
      _
    %310 = vsyncpa [#allocation4], 1
    %311 = vsyncpa [#allocation7], 1
    %312 = vsyncpa [#allocation5], 1

</llo_original>
